<compile_context>
chip_gen: v5e
topology: v5e:2x2
jax: 0.10.0
libtpu: 0.0.40
codegen_flags: <defaults>
</compile_context>

<pallas_src>
import functools

import jax
import jax.numpy as jnp
from jax.experimental import pallas as pl
from jax.experimental.pallas import tpu as pltpu

LANE = 128
SUBLANE = 8


def _round_up(x, m):
    return ((x + m - 1) // m) * m


def _vmem_limit_bytes():
    """Per-generation VMEM budget: ~3/4 of physical, capped at 100 MiB."""
    default = 32 * 1024 * 1024
    try:
        info = pltpu.get_tpu_info()
        cap = getattr(info, "vmem_capacity_bytes", None)
        if cap is None:
            return default
        return int(min(cap * 3 // 4, 100 * 1024 * 1024))
    except Exception:
        return default


# ---------------------------------------------------------------------------
# Fused kernel (all layers + log_softmax in one body)
# ---------------------------------------------------------------------------
def _make_fused_mlp_kernel(n_layers, out_real):
    """refs = (x_ref, w1_ref, b1_ref, ..., wn_ref, bn_ref, o_ref)."""

    def kernel(*refs):
        x_ref = refs[0]
        o_ref = refs[-1]

        # In-kernel bf16 cast of the f32 input tile (MXU operand).
        h = x_ref[...].astype(jnp.bfloat16)
        for li in range(n_layers):
            w_ref = refs[1 + 2 * li]
            b_ref = refs[2 + 2 * li]
            # MXU matmul with f32 accumulation; bias add stays in f32 (VPU).
            z = jnp.dot(h, w_ref[...], preferred_element_type=jnp.float32)
            z = z + b_ref[...]  # (1, N_pad) f32 bias, broadcast once (unrolled body)
            if li < n_layers - 1:
                # Dropout(0.5): identity in eval/inference mode.
                # TODO(synk): training-mode dropout via pltpu.prng_random_bits.
                h = z.astype(jnp.bfloat16)  # back to bf16 for the next MXU op
            else:
                # Lane-dense (padded-to-128) log_softmax; mask padded lanes to -inf
                # so they don't perturb the max / sum.
                if z.shape[-1] != out_real:
                    lane_id = jax.lax.broadcasted_iota(jnp.int32, z.shape, 1)
                    z = jnp.where(lane_id < out_real, z, -jnp.inf)
                m = jnp.max(z, axis=-1, keepdims=True)
                s = z - m
                lse = jnp.log(jnp.sum(jnp.exp(s), axis=-1, keepdims=True))
                logp = s - lse
                # Narrow store: only the real logit columns go back to HBM.
                o_ref[...] = logp[:, :out_real].astype(o_ref.dtype)

    return kernel


# ---------------------------------------------------------------------------
# One-time parameter prep (outside jit): bf16 weights, f32 biases, lane padding
# ---------------------------------------------------------------------------
def prepare_mlp_params(params):
    """Pad every layer's output dim to a multiple of 128 lanes (zeros), and pad
    each subsequent layer's input dim to match. Returns (prepped, out_real)."""
    params = tuple(params)
    prepped = []
    prev_n_pad = None
    for w_t, b in params:  # w_t stored as (in, out)
        k, n = w_t.shape
        k_pad = prev_n_pad if prev_n_pad is not None else k
        n_pad = _round_up(max(n, LANE), LANE)
        w = jnp.zeros((k_pad, n_pad), jnp.bfloat16).at[:k, :n].set(w_t.astype(jnp.bfloat16))
        b2 = jnp.zeros((1, n_pad), jnp.float32).at[0, :n].set(b.astype(jnp.float32))
        prepped.append((w, b2))
        prev_n_pad = n_pad
    out_real = params[-1][0].shape[1]
    return tuple(prepped), out_real


# ---------------------------------------------------------------------------
# Wrapper
# ---------------------------------------------------------------------------
@functools.partial(jax.jit, static_argnames=("out_real",))
def mlp_forward(x, prepped_params, *, out_real):
    """x: (B, in_feats) f32.  prepped_params: output of prepare_mlp_params."""
    B, in_feats = x.shape
    n_layers = len(prepped_params)

    # Batch tiling: big sublane-aligned tiles amortize per-step overhead, but
    # clamp so the grid has >=2 steps when B is large (v7x megacore split).
    half_b = -(-B // 2)
    tile_b = min(2048, max(SUBLANE, _round_up(half_b, SUBLANE)))
    grid = pl.cdiv(B, tile_b)  # ragged last block: OOB rows masked on writeback

    inputs = [x]
    in_specs = [pl.BlockSpec((tile_b, in_feats), lambda i: (i, 0))]
    for w, b2 in prepped_params:
        inputs += [w, b2]
        # Constant index_map => weights/bias stay resident in VMEM across grid steps.
        in_specs += [
            pl.BlockSpec(w.shape, lambda i: (0, 0)),
            pl.BlockSpec(b2.shape, lambda i: (0, 0)),
        ]

    # Narrow f32 output: (B, out_real). Last block dim equals full array dim, so
    # the (8,128) constraint is satisfied; masked vst in exchange for ~12.8x
    # fewer writeback bytes vs. a 128-lane padded f32 output.
    out_spec = pl.BlockSpec((tile_b, out_real), lambda i: (i, 0))

    flops = 2 * B * sum(w.shape[0] * w.shape[1] for w, _ in prepped_params)
    transcendentals = B * prepped_params[-1][0].shape[1]  # exp in softmax
    bytes_accessed = (
        B * in_feats * 4
        + B * out_real * 4
        + sum(w.size * 2 + b.size * 4 for w, b in prepped_params)
    )

    kernel = _make_fused_mlp_kernel(n_layers, out_real)

    out = pl.pallas_call(
        kernel,
        out_shape=jax.ShapeDtypeStruct((B, out_real), jnp.float32),
        grid=(grid,),
        in_specs=in_specs,
        out_specs=out_spec,
        compiler_params=pltpu.CompilerParams(
            dimension_semantics=("parallel",),       # megacore split on v7x
            vmem_limit_bytes=_vmem_limit_bytes(),    # per-generation budget
        ),
        cost_estimate=pl.CostEstimate(
            flops=int(flops),
            transcendentals=int(transcendentals),
            bytes_accessed=int(bytes_accessed),
        ),
    )(*inputs)

    return out


# ---------------------------------------------------------------------------
# Params + pure-JAX references
# ---------------------------------------------------------------------------
def init_mlp_params(key, in_feats, hidden_layers, out):
    """Deterministic parameter init mirroring nn.Linear shapes (W stored transposed)."""
    dims = [in_feats] + list(hidden_layers) + [out]
    params = []
    for i in range(len(dims) - 1):
        key, kw, kb = jax.random.split(key, 3)
        w_t = jax.random.normal(kw, (dims[i], dims[i + 1]), jnp.float32) * 0.02
        b = jax.random.normal(kb, (dims[i + 1],), jnp.float32) * 0.02
        params.append((w_t, b))
    return params


def mlp_reference_bf16(x, params):
    """Same math as the kernel (bf16 MXU operands, f32 accumulation)."""
    h = x.astype(jnp.bfloat16)
    n = len(params)
    for i, (w_t, b) in enumerate(params):
        z = jnp.dot(h, w_t.astype(jnp.bfloat16), preferred_element_type=jnp.float32)
        z = z + b.astype(jnp.float32)
        if i < n - 1:
            h = z.astype(jnp.bfloat16)
        else:
            return jax.nn.log_softmax(z, axis=-1)


def mlp_reference_f32(x, params):
    """Full-precision semantic reference of the PyTorch module (eval mode)."""
    h = x
    for w_t, b in params:
        h = h @ w_t + b
    return jax.nn.log_softmax(h, axis=-1)


# ---------------------------------------------------------------------------
# Main
# ---------------------------------------------------------------------------
if __name__ == "__main__":
    key = jax.random.PRNGKey(0)
    key, kx = jax.random.split(key)

    batch = 8
    in_feats = 32
    hidden_layers = [64, 32]
    out = 10

    x = jax.random.normal(kx, (batch, in_feats), jnp.float32)
    params = init_mlp_params(key, in_feats, hidden_layers, out)
    prepped, out_real = prepare_mlp_params(params)

    y = mlp_forward(x, prepped, out_real=out_real)
    y = jax.block_until_ready(y)
    assert y.shape == (batch, out)

    y_ref_bf16 = mlp_reference_bf16(x, params)
    y_ref_f32 = mlp_reference_f32(x, params)
    assert jnp.allclose(y, y_ref_bf16, atol=1e-3, rtol=1e-3), "mismatch vs bf16-matched reference"
    assert jnp.allclose(y, y_ref_f32, atol=5e-2, rtol=5e-2), "mismatch vs f32 semantic reference"

    # Exercise the ragged-batch path (non-multiple-of-tile batch, >=2 grid steps).
    x2 = jax.random.normal(jax.random.PRNGKey(1), (37, in_feats), jnp.float32)
    y2 = jax.block_until_ready(mlp_forward(x2, prepped, out_real=out_real))
    assert y2.shape == (37, out)
    assert jnp.allclose(y2, mlp_reference_bf16(x2, params), atol=1e-3, rtol=1e-3)

    print("KERNEL_OK")
</pallas_src>

<mosaic_0001>
module attributes {stable_mosaic.version = 11 : i64} {
  func.func @kernel(%arg0: i32, %arg1: memref<8x32xf32, #tpu.memory_space<vmem>>, %arg2: memref<32x128xbf16, #tpu.memory_space<vmem>>, %arg3: memref<1x128xf32, #tpu.memory_space<vmem>>, %arg4: memref<128x128xbf16, #tpu.memory_space<vmem>>, %arg5: memref<1x128xf32, #tpu.memory_space<vmem>>, %arg6: memref<128x128xbf16, #tpu.memory_space<vmem>>, %arg7: memref<1x128xf32, #tpu.memory_space<vmem>>, %arg8: memref<8x10xf32, #tpu.memory_space<vmem>>) attributes {dimension_semantics = [#tpu.dimension_semantics<parallel>], iteration_bounds = array<i64: 1>, scalar_prefetch = 0 : i64, scratch_operands = 0 : i64, tpu.core_type = #tpu.core_type<tc>, window_params = [{transform_indices = @transform_0, window_bounds = array<i64: 8, 32>}, {pipeline_mode = #tpu.pipeline_mode<synchronous>, transform_indices = @transform_1, window_bounds = array<i64: 32, 128>}, {pipeline_mode = #tpu.pipeline_mode<synchronous>, transform_indices = @transform_2, window_bounds = array<i64: 1, 128>}, {pipeline_mode = #tpu.pipeline_mode<synchronous>, transform_indices = @transform_3, window_bounds = array<i64: 128, 128>}, {pipeline_mode = #tpu.pipeline_mode<synchronous>, transform_indices = @transform_4, window_bounds = array<i64: 1, 128>}, {pipeline_mode = #tpu.pipeline_mode<synchronous>, transform_indices = @transform_5, window_bounds = array<i64: 128, 128>}, {pipeline_mode = #tpu.pipeline_mode<synchronous>, transform_indices = @transform_6, window_bounds = array<i64: 1, 128>}, {transform_indices = @transform_7, window_bounds = array<i64: 8, 10>}]} {
    %c0 = arith.constant 0 : index
    %c0_0 = arith.constant 0 : index
    %0 = vector.load %arg1[%c0, %c0_0] : memref<8x32xf32, #tpu.memory_space<vmem>>, vector<8x32xf32>
    %1 = arith.truncf %0 : vector<8x32xf32> to vector<8x32xbf16>
    %c0_1 = arith.constant 0 : index
    %c0_2 = arith.constant 0 : index
    %2 = vector.load %arg2[%c0_1, %c0_2] : memref<32x128xbf16, #tpu.memory_space<vmem>>, vector<32x128xbf16>
    %cst = arith.constant dense<0.000000e+00> : vector<8x128xf32>
    %3 = tpu.matmul %1, %2, %cst {dimension_numbers = #tpu.dot_dimension_numbers<[1], [0], [0], [1], [0, 0, 1, 1], [], []>} : vector<8x32xbf16>, vector<32x128xbf16>, vector<8x128xf32> -> vector<8x128xf32>
    %c0_3 = arith.constant 0 : index
    %c0_4 = arith.constant 0 : index
    %4 = vector.load %arg3[%c0_3, %c0_4] : memref<1x128xf32, #tpu.memory_space<vmem>>, vector<1x128xf32>
    %5 = vector.broadcast %4 : vector<1x128xf32> to vector<8x128xf32>
    %6 = arith.addf %3, %5 : vector<8x128xf32>
    %7 = arith.truncf %6 : vector<8x128xf32> to vector<8x128xbf16>
    %c0_5 = arith.constant 0 : index
    %c0_6 = arith.constant 0 : index
    %8 = vector.load %arg4[%c0_5, %c0_6] : memref<128x128xbf16, #tpu.memory_space<vmem>>, vector<128x128xbf16>
    %cst_7 = arith.constant dense<0.000000e+00> : vector<8x128xf32>
    %9 = tpu.matmul %7, %8, %cst_7 {dimension_numbers = #tpu.dot_dimension_numbers<[1], [0], [0], [1], [0, 0, 1, 1], [], []>} : vector<8x128xbf16>, vector<128x128xbf16>, vector<8x128xf32> -> vector<8x128xf32>
    %c0_8 = arith.constant 0 : index
    %c0_9 = arith.constant 0 : index
    %10 = vector.load %arg5[%c0_8, %c0_9] : memref<1x128xf32, #tpu.memory_space<vmem>>, vector<1x128xf32>
    %11 = vector.broadcast %10 : vector<1x128xf32> to vector<8x128xf32>
    %12 = arith.addf %9, %11 : vector<8x128xf32>
    %13 = arith.truncf %12 : vector<8x128xf32> to vector<8x128xbf16>
    %c0_10 = arith.constant 0 : index
    %c0_11 = arith.constant 0 : index
    %14 = vector.load %arg6[%c0_10, %c0_11] : memref<128x128xbf16, #tpu.memory_space<vmem>>, vector<128x128xbf16>
    %cst_12 = arith.constant dense<0.000000e+00> : vector<8x128xf32>
    %15 = tpu.matmul %13, %14, %cst_12 {dimension_numbers = #tpu.dot_dimension_numbers<[1], [0], [0], [1], [0, 0, 1, 1], [], []>} : vector<8x128xbf16>, vector<128x128xbf16>, vector<8x128xf32> -> vector<8x128xf32>
    %c0_13 = arith.constant 0 : index
    %c0_14 = arith.constant 0 : index
    %16 = vector.load %arg7[%c0_13, %c0_14] : memref<1x128xf32, #tpu.memory_space<vmem>>, vector<1x128xf32>
    %17 = vector.broadcast %16 : vector<1x128xf32> to vector<8x128xf32>
    %18 = arith.addf %15, %17 : vector<8x128xf32>
    %19 = tpu.iota {dimensions = array<i32: 1>} : vector<8x128xi32>
    %c10_i32 = arith.constant 10 : i32
    %20 = vector.broadcast %c10_i32 : i32 to vector<8x128xi32>
    %21 = arith.cmpi slt, %19, %20 : vector<8x128xi32>
    %cst_15 = arith.constant 0xFF800000 : f32
    %22 = vector.broadcast %cst_15 : f32 to vector<8x128xf32>
    %23 = arith.select %21, %18, %22 : vector<8x128xi1>, vector<8x128xf32>
    %cst_16 = arith.constant dense<0xFF800000> : vector<8xf32>
    %24 = vector.multi_reduction <maximumf>, %23, %cst_16 [1] : vector<8x128xf32> to vector<8xf32>
    %25 = vector.shape_cast %24 : vector<8xf32> to vector<8x1xf32>
    %26 = vector.broadcast %25 : vector<8x1xf32> to vector<8x128xf32>
    %27 = arith.subf %23, %26 : vector<8x128xf32>
    %28 = math.exp %27 : vector<8x128xf32>
    %cst_17 = arith.constant dense<0.000000e+00> : vector<8xf32>
    %29 = vector.multi_reduction <add>, %28, %cst_17 [1] : vector<8x128xf32> to vector<8xf32>
    %30 = vector.shape_cast %29 : vector<8xf32> to vector<8x1xf32>
    %31 = math.log %30 : vector<8x1xf32>
    %32 = vector.broadcast %31 : vector<8x1xf32> to vector<8x128xf32>
    %33 = arith.subf %27, %32 : vector<8x128xf32>
    %34 = vector.extract_strided_slice %33 {offsets = [0, 0], sizes = [8, 10], strides = [1, 1]} : vector<8x128xf32> to vector<8x10xf32>
    %c0_18 = arith.constant 0 : index
    %c0_19 = arith.constant 0 : index
    %35 = vector.load %arg8[%c0_18, %c0_19] : memref<8x10xf32, #tpu.memory_space<vmem>>, vector<8x10xf32>
    tpu.vector_store %arg8[%c0_18, %c0_19], %34 {strides = array<i32>} : memref<8x10xf32, #tpu.memory_space<vmem>>, vector<8x10xf32>,
    return
  }
  func.func @transform_0(%arg0: i32) -> (i32, i32) {
    %c0_i32 = arith.constant 0 : i32
    %c0_i32_0 = arith.constant 0 : i32
    return %arg0, %c0_i32 : i32, i32
  }
  func.func @transform_1(%arg0: i32) -> (i32, i32) {
    %c0_i32 = arith.constant 0 : i32
    %c0_i32_0 = arith.constant 0 : i32
    %c0_i32_1 = arith.constant 0 : i32
    return %c0_i32, %c0_i32_0 : i32, i32
  }
  func.func @transform_2(%arg0: i32) -> (i32, i32) {
    %c0_i32 = arith.constant 0 : i32
    %c0_i32_0 = arith.constant 0 : i32
    %c0_i32_1 = arith.constant 0 : i32
    return %c0_i32, %c0_i32_0 : i32, i32
  }
  func.func @transform_3(%arg0: i32) -> (i32, i32) {
    %c0_i32 = arith.constant 0 : i32
    %c0_i32_0 = arith.constant 0 : i32
    %c0_i32_1 = arith.constant 0 : i32
    return %c0_i32, %c0_i32_0 : i32, i32
  }
  func.func @transform_4(%arg0: i32) -> (i32, i32) {
    %c0_i32 = arith.constant 0 : i32
    %c0_i32_0 = arith.constant 0 : i32
    %c0_i32_1 = arith.constant 0 : i32
    return %c0_i32, %c0_i32_0 : i32, i32
  }
  func.func @transform_5(%arg0: i32) -> (i32, i32) {
    %c0_i32 = arith.constant 0 : i32
    %c0_i32_0 = arith.constant 0 : i32
    %c0_i32_1 = arith.constant 0 : i32
    return %c0_i32, %c0_i32_0 : i32, i32
  }
  func.func @transform_6(%arg0: i32) -> (i32, i32) {
    %c0_i32 = arith.constant 0 : i32
    %c0_i32_0 = arith.constant 0 : i32
    %c0_i32_1 = arith.constant 0 : i32
    return %c0_i32, %c0_i32_0 : i32, i32
  }
  func.func @transform_7(%arg0: i32) -> (i32, i32) {
    %c0_i32 = arith.constant 0 : i32
    %c0_i32_0 = arith.constant 0 : i32
    return %arg0, %c0_i32 : i32, i32
  }
}

</mosaic_0001>

<llo_original>
// kernel: mlp_forward.1
$region0: #{mlp_forward.1}
  #allocation0 [shape = 'u32[]', space=smem, size = 0x4, offset = 0x4, fixed_abs, tag = 'smem constant byte address 0x4 - core index']
  #allocation1 [shape = 'u32[72,128]{1,0:T(1,128)}', space=vmem, size = 0x9000, scoped, tag = 'internal scratch']
  %s0 = inlined_call_operand.hbm [shape: f32[8,32], index: 0, kind: input, shape index: {}]
  %s1 = inlined_call_operand.hbm [shape: bf16[32,128], index: 1, kind: input, shape index: {}]
  %s2 = inlined_call_operand.vmem [shape: f32[1,128], index: 2, kind: input, shape index: {}]
  %s3 = inlined_call_operand.hbm [shape: bf16[128,128], index: 3, kind: input, shape index: {}]
  %s4 = inlined_call_operand.vmem [shape: f32[1,128], index: 4, kind: input, shape index: {}]
  %s5 = inlined_call_operand.hbm [shape: bf16[128,128], index: 5, kind: input, shape index: {}]
  %s6 = inlined_call_operand.vmem [shape: f32[1,128], index: 6, kind: input, shape index: {}]
  %s7 = inlined_call_operand.hbm [shape: f32[8,10], index: 7, kind: output, shape index: {}]
  %s8 = sld [smem:[#allocation0]]
  $region54: #{mlp_forward.1} parent=0
    _
  %s10 = ssub.s32 1, %s8
  %s11 = scalar_select 0, %s10, %s8
  $region1: #{mlp_forward.1} parent=0
    #allocation2 [shape = 'u8[4096]{0}', space=vmem, size = 0x1000, scoped, tag = 'input window, operand 0, single buffered']
    #allocation3 [shape = 's32[1]{0}', space=sflag, size = 0x4, scoped, tag = 'scoped memory for mlp_forward.1']
    #allocation4 [shape = 's32[1]{0}', space=sflag, size = 0x4, scoped, tag = 'scoped memory for mlp_forward.1']
    #allocation5 [shape = 'u8[8192]{0}', space=vmem, size = 0x2000, scoped, tag = 'input window, operand 1, single buffered']
    #allocation6 [shape = 's32[1]{0}', space=sflag, size = 0x4, scoped, tag = 'scoped memory for mlp_forward.1']
    #allocation7 [shape = 'u8[32768]{0}', space=vmem, size = 0x8000, scoped, tag = 'input window, operand 3, single buffered']
    #allocation8 [shape = 'u8[32768]{0}', space=vmem, size = 0x8000, scoped, tag = 'input window, operand 5, single buffered']
    #allocation9 [shape = 's32[1]{0}', space=sflag, size = 0x4, scoped, tag = 'scoped memory for mlp_forward.1']
    #allocation10 [shape = 'u8[4096]{0}', space=vmem, size = 0x1000, scoped, tag = 'output window, operand 0, single buffered']
    %12 = vsyncpa [#allocation3], 0
    %13 = vsyncpa [#allocation6], 0
    %14 = vsyncpa [#allocation9], 0
    %15 = vsyncpa [#allocation4], 0
    // Predicated region
    $region2: #{mlp_forward.1} parent=1 // pred_check
      _
    $region3: #{mlp_forward.1} parent=1 // pred_check_branch
      %17 = sbr.rel (0) target = $region5
    $region4: #{mlp_forward.1} parent=1 // pred_region
      %19 = vsyncadd [#allocation3], 0
      %s21 = sshll.u32 %s0, 4
      %s22 = int_to_ptr.hbm [resolvable:$true] %s21
      %s23 = sshll.u32 [#allocation2], 4
      %s24 = int_to_ptr.vmem [resolvable:$true] %s23
      %26 = dma.hbm_to_vmem [thread:$0]  %s22, 128, %s24, [#allocation3]
    $region5: #{mlp_forward.1} parent=1 // pred_fallthru
      _
    // Predicated region
    $region6: #{mlp_forward.1} parent=1 // pred_check
      _
    $region7: #{mlp_forward.1} parent=1 // pred_check_branch
      %28 = sbr.rel (0) target = $region9
    $region8: #{mlp_forward.1} parent=1 // pred_region
      %30 = vsyncadd [#allocation6], 0
      %s31 = sshll.u32 %s1, 4
      %s32 = int_to_ptr.hbm [resolvable:$true] %s31
      %s33 = sshll.u32 [#allocation5], 4
      %s34 = int_to_ptr.vmem [resolvable:$true] %s33
      %39 = dma.hbm_to_vmem [thread:$0]  %s32, 256, %s34, [#allocation6], 64, 64, 4
    $region9: #{mlp_forward.1} parent=1 // pred_fallthru
      _
    // Predicated region
    $region10: #{mlp_forward.1} parent=1 // pred_check
      _
    $region11: #{mlp_forward.1} parent=1 // pred_check_branch
      %41 = sbr.rel (0) target = $region13
    $region12: #{mlp_forward.1} parent=1 // pred_region
      _
    $region13: #{mlp_forward.1} parent=1 // pred_fallthru
      _
    // Predicated region
    $region14: #{mlp_forward.1} parent=1 // pred_check
      _
    $region15: #{mlp_forward.1} parent=1 // pred_check_branch
      %43 = sbr.rel (0) target = $region17
    $region16: #{mlp_forward.1} parent=1 // pred_region
      %45 = vsyncadd [#allocation6], 0
      %s46 = sshll.u32 %s3, 4
      %s47 = int_to_ptr.hbm [resolvable:$true] %s46
      %s48 = sshll.u32 [#allocation7], 4
      %s49 = int_to_ptr.vmem [resolvable:$true] %s48
      %54 = dma.hbm_to_vmem [thread:$0]  %s47, 1024, %s49, [#allocation6], 64, 64, 4
    $region17: #{mlp_forward.1} parent=1 // pred_fallthru
      _
    // Predicated region
    $region18: #{mlp_forward.1} parent=1 // pred_check
      _
    $region19: #{mlp_forward.1} parent=1 // pred_check_branch
      %56 = sbr.rel (0) target = $region21
    $region20: #{mlp_forward.1} parent=1 // pred_region
      _
    $region21: #{mlp_forward.1} parent=1 // pred_fallthru
      _
    // Predicated region
    $region22: #{mlp_forward.1} parent=1 // pred_check
      _
    $region23: #{mlp_forward.1} parent=1 // pred_check_branch
      %58 = sbr.rel (0) target = $region25
    $region24: #{mlp_forward.1} parent=1 // pred_region
      %60 = vsyncadd [#allocation9], 0
      %s61 = sshll.u32 %s5, 4
      %s62 = int_to_ptr.hbm [resolvable:$true] %s61
      %s63 = sshll.u32 [#allocation8], 4
      %s64 = int_to_ptr.vmem [resolvable:$true] %s63
      %69 = dma.hbm_to_vmem [thread:$0]  %s62, 1024, %s64, [#allocation9], 64, 64, 4
    $region25: #{mlp_forward.1} parent=1 // pred_fallthru
      _
    // Predicated region
    $region26: #{mlp_forward.1} parent=1 // pred_check
      _
    $region27: #{mlp_forward.1} parent=1 // pred_check_branch
      %71 = sbr.rel (0) target = $region29
    $region28: #{mlp_forward.1} parent=1 // pred_region
      _
    $region29: #{mlp_forward.1} parent=1 // pred_fallthru
      _
    // Predicated region
    $region30: #{mlp_forward.1} parent=1 // pred_check
      _
    $region31: #{mlp_forward.1} parent=1 // pred_check_branch
      %73 = sbr.rel (0) target = $region33
    $region32: #{mlp_forward.1} parent=1 // pred_region
      %75 = dma.done [#allocation3], 128
    $region33: #{mlp_forward.1} parent=1 // pred_fallthru
      _
    // Predicated region
    $region34: #{mlp_forward.1} parent=1 // pred_check
      _
    $region35: #{mlp_forward.1} parent=1 // pred_check_branch
      %77 = sbr.rel (0) target = $region37
    $region36: #{mlp_forward.1} parent=1 // pred_region
      %79 = dma.done [#allocation6], 256
    $region37: #{mlp_forward.1} parent=1 // pred_fallthru
      _
    // Predicated region
    $region38: #{mlp_forward.1} parent=1 // pred_check
      _
    $region39: #{mlp_forward.1} parent=1 // pred_check_branch
      %81 = sbr.rel (0) target = $region41
    $region40: #{mlp_forward.1} parent=1 // pred_region
      %83 = dma.done [#allocation6], 1024
    $region41: #{mlp_forward.1} parent=1 // pred_fallthru
      _
    // Predicated region
    $region42: #{mlp_forward.1} parent=1 // pred_check
      _
    $region43: #{mlp_forward.1} parent=1 // pred_check_branch
      %85 = sbr.rel (0) target = $region45
    $region44: #{mlp_forward.1} parent=1 // pred_region
      %87 = dma.done [#allocation9], 1024
    $region45: #{mlp_forward.1} parent=1 // pred_fallthru
      _
    %v89 = vld [vmem:[#allocation2] sm:$0xff]
    %v90 = vpack.c.bf16 %v89, %v89
    %v91 = vld [vmem:[#allocation5] sm:$0xf]
    %v92 = vld [vmem:[#allocation5 + $0x4] sm:$0xf]
    %v93 = vld [vmem:[#allocation5 + $0x8] sm:$0xf]
    %v94 = vld [vmem:[#allocation5 + $0xc] sm:$0xf]
    %v95 = vld [vmem:[%s2] sm:$0x1]
    %v97 = vperm.slane %v95, 0
    %v103 = vunpack.c.l.b16 %v91
    %v104 = vunpack.c.l.b16 %v92
    %v105 = vunpack.c.l.b16 %v93
    %v106 = vunpack.c.l.b16 %v94
    %v107 = vpack.c.b16 %v104, %v103
    %v108 = vpack.c.b16 %v106, %v105
    %vm111 = vcmask 261120
    %v113 = vsel %vm111, %v90, 0
    %115 = vmatpush.bf16.msra.mxu0 0
    %116 = vmatpush.bf16.msra.mxu0 0
    %117 = vmatpush.bf16.msra.mxu0 0
    %118 = vmatpush.bf16.msra.mxu0 0
    %119 = vmatpush.bf16.msra.mxu0 0
    %120 = vmatpush.bf16.msra.mxu0 0
    %121 = vmatpush.bf16.msra.mxu0 %v108
    %122 = vmatpush.bf16.msra.mxu0 %v107
    %123 = vmatmul.bf16.gmra.mxu0 %v113
    %v124 = vpop.f32.mrf.mxu0
    %v125 = vadd.f32 %v97, %v124
    %v126 = vpop.f32.mrf.mxu0
    %127 = vdwg.mxu0
    %v128 = vpack.c.bf16 %v125, %v125
    %v129 = vld [vmem:[#allocation7] sm:$0xf]
    %v130 = vld [vmem:[#allocation7 + $0x4] sm:$0xf]
    %v131 = vld [vmem:[#allocation7 + $0x8] sm:$0xf]
    %v132 = vld [vmem:[#allocation7 + $0xc] sm:$0xf]
    %v133 = vld [vmem:[#allocation7 + $0x10] sm:$0xf]
    %v134 = vld [vmem:[#allocation7 + $0x14] sm:$0xf]
    %v135 = vld [vmem:[#allocation7 + $0x18] sm:$0xf]
    %v136 = vld [vmem:[#allocation7 + $0x1c] sm:$0xf]
    %v137 = vld [vmem:[#allocation7 + $0x20] sm:$0xf]
    %v138 = vld [vmem:[#allocation7 + $0x24] sm:$0xf]
    %v139 = vld [vmem:[#allocation7 + $0x28] sm:$0xf]
    %v140 = vld [vmem:[#allocation7 + $0x2c] sm:$0xf]
    %v141 = vld [vmem:[#allocation7 + $0x30] sm:$0xf]
    %v142 = vld [vmem:[#allocation7 + $0x34] sm:$0xf]
    %v143 = vld [vmem:[#allocation7 + $0x38] sm:$0xf]
    %v144 = vld [vmem:[#allocation7 + $0x3c] sm:$0xf]
    %v145 = vld [vmem:[%s4] sm:$0x1]
    %v147 = vperm.slane %v145, 0
    %v165 = vunpack.c.l.b16 %v129
    %v166 = vunpack.c.l.b16 %v130
    %v167 = vunpack.c.l.b16 %v131
    %v168 = vunpack.c.l.b16 %v132
    %v169 = vunpack.c.l.b16 %v133
    %v170 = vunpack.c.l.b16 %v134
    %v171 = vunpack.c.l.b16 %v135
    %v172 = vunpack.c.l.b16 %v136
    %v173 = vunpack.c.l.b16 %v137
    %v174 = vunpack.c.l.b16 %v138
    %v175 = vunpack.c.l.b16 %v139
    %v176 = vunpack.c.l.b16 %v140
    %v177 = vunpack.c.l.b16 %v141
    %v178 = vunpack.c.l.b16 %v142
    %v179 = vunpack.c.l.b16 %v143
    %v180 = vunpack.c.l.b16 %v144
    %v181 = vpack.c.b16 %v166, %v165
    %v182 = vpack.c.b16 %v168, %v167
    %v183 = vpack.c.b16 %v170, %v169
    %v184 = vpack.c.b16 %v172, %v171
    %v185 = vpack.c.b16 %v174, %v173
    %v186 = vpack.c.b16 %v176, %v175
    %v187 = vpack.c.b16 %v178, %v177
    %v188 = vpack.c.b16 %v180, %v179
    %197 = vmatpush.bf16.msra.mxu0 %v188
    %198 = vmatpush.bf16.msra.mxu0 %v187
    %199 = vmatpush.bf16.msra.mxu0 %v186
    %200 = vmatpush.bf16.msra.mxu0 %v185
    %201 = vmatpush.bf16.msra.mxu0 %v184
    %202 = vmatpush.bf16.msra.mxu0 %v183
    %203 = vmatpush.bf16.msra.mxu0 %v182
    %204 = vmatpush.bf16.msra.mxu0 %v181
    %205 = vmatmul.bf16.gmra.mxu0 %v128
    %v206 = vpop.f32.mrf.mxu0
    %v207 = vadd.f32 %v147, %v206
    %v208 = vpop.f32.mrf.mxu0
    %209 = vdwg.mxu0
    %v210 = vpack.c.bf16 %v207, %v207
    %v211 = vld [vmem:[#allocation8] sm:$0xf]
    %v212 = vld [vmem:[#allocation8 + $0x4] sm:$0xf]
    %v213 = vld [vmem:[#allocation8 + $0x8] sm:$0xf]
    %v214 = vld [vmem:[#allocation8 + $0xc] sm:$0xf]
    %v215 = vld [vmem:[#allocation8 + $0x10] sm:$0xf]
    %v216 = vld [vmem:[#allocation8 + $0x14] sm:$0xf]
    %v217 = vld [vmem:[#allocation8 + $0x18] sm:$0xf]
    %v218 = vld [vmem:[#allocation8 + $0x1c] sm:$0xf]
    %v219 = vld [vmem:[#allocation8 + $0x20] sm:$0xf]
    %v220 = vld [vmem:[#allocation8 + $0x24] sm:$0xf]
    %v221 = vld [vmem:[#allocation8 + $0x28] sm:$0xf]
    %v222 = vld [vmem:[#allocation8 + $0x2c] sm:$0xf]
    %v223 = vld [vmem:[#allocation8 + $0x30] sm:$0xf]
    %v224 = vld [vmem:[#allocation8 + $0x34] sm:$0xf]
    %v225 = vld [vmem:[#allocation8 + $0x38] sm:$0xf]
    %v226 = vld [vmem:[#allocation8 + $0x3c] sm:$0xf]
    %v227 = vld [vmem:[%s6] sm:$0x1]
    %v229 = vperm.slane %v227, 0
    %v247 = vunpack.c.l.b16 %v211
    %v248 = vunpack.c.l.b16 %v212
    %v249 = vunpack.c.l.b16 %v213
    %v250 = vunpack.c.l.b16 %v214
    %v251 = vunpack.c.l.b16 %v215
    %v252 = vunpack.c.l.b16 %v216
    %v253 = vunpack.c.l.b16 %v217
    %v254 = vunpack.c.l.b16 %v218
    %v255 = vunpack.c.l.b16 %v219
    %v256 = vunpack.c.l.b16 %v220
    %v257 = vunpack.c.l.b16 %v221
    %v258 = vunpack.c.l.b16 %v222
    %v259 = vunpack.c.l.b16 %v223
    %v260 = vunpack.c.l.b16 %v224
    %v261 = vunpack.c.l.b16 %v225
    %v262 = vunpack.c.l.b16 %v226
    %v263 = vpack.c.b16 %v248, %v247
    %v264 = vpack.c.b16 %v250, %v249
    %v265 = vpack.c.b16 %v252, %v251
    %v266 = vpack.c.b16 %v254, %v253
    %v267 = vpack.c.b16 %v256, %v255
    %v268 = vpack.c.b16 %v258, %v257
    %v269 = vpack.c.b16 %v260, %v259
    %v270 = vpack.c.b16 %v262, %v261
    %279 = vmatpush.bf16.msra.mxu0 %v270
    %280 = vmatpush.bf16.msra.mxu0 %v269
    %281 = vmatpush.bf16.msra.mxu0 %v268
    %282 = vmatpush.bf16.msra.mxu0 %v267
    %283 = vmatpush.bf16.msra.mxu0 %v266
    %284 = vmatpush.bf16.msra.mxu0 %v265
    %285 = vmatpush.bf16.msra.mxu0 %v264
    %286 = vmatpush.bf16.msra.mxu0 %v263
    %287 = vmatmul.bf16.gmra.mxu0 %v210
    %v288 = vpop.f32.mrf.mxu0
    %v289 = vadd.f32 %v229, %v288
    %v290 = vpop.f32.mrf.mxu0
    %291 = vdwg.mxu0
    %v292 = vlaneseq
    %v293 = vand.u32 %v292, 127
    %vm294 = vcmp.lt.s32.totalorder %v293, 10
    %v295 = vsel %vm294, %v289, -inf
    %296 = vmax.xlane.f32.xlu0 %v295
    %v297 = vpop.xlane.xlu0 %296
    %v298 = vsub.f32 %v295, %v297
    %v299 = vmul.f32 %v298, 1.442695
    %v300 = vpow.pop %v299
    %301 = vadd.xlane.f32.xlu0 %v300
    %v302 = vpop.xlane.xlu0 %301
    %v303 = vlog2.pop %v302
    %v304 = vmul.f32 %v303, 0.6931472
    %v305 = vsub.f32 %v298, %v304
    %vm306 = vcmask 80896
    %307 = vst.msk [vmem:[#allocation10] sm:$0xff] %vm306, %v305
    // Predicated region
    $region46: #{mlp_forward.1} parent=1 // pred_check
      _
    $region47: #{mlp_forward.1} parent=1 // pred_check_branch
      %309 = sbr.rel (0) target = $region49
    $region48: #{mlp_forward.1} parent=1 // pred_region
      %311 = vsyncadd [#allocation4], 0
      %s313 = sshll.u32 [#allocation10], 4
      %s314 = int_to_ptr.vmem [resolvable:$true] %s313
      %s315 = sshll.u32 %s7, 4
      %s316 = int_to_ptr.hbm [resolvable:$true] %s315
      %318 = dma.vmem_to_hbm [thread:$0]  %s314, 128, %s316, [#allocation4]
    $region49: #{mlp_forward.1} parent=1 // pred_fallthru
      _
    // Predicated region
    $region50: #{mlp_forward.1} parent=1 // pred_check
      _
    $region51: #{mlp_forward.1} parent=1 // pred_check_branch
      %320 = sbr.rel (0) target = $region53
    $region52: #{mlp_forward.1} parent=1 // pred_region
      %322 = dma.done [#allocation4], 128
    $region53: #{mlp_forward.1} parent=1 // pred_fallthru
      _
    %323 = vsyncpa [#allocation3], 1
    %324 = vsyncpa [#allocation6], 1
    %325 = vsyncpa [#allocation9], 1
    %326 = vsyncpa [#allocation4], 1

</llo_original>
